<compile_context>
chip_gen: v7x
topology: tpu7x:2x2x1
jax: 0.10.0
libtpu: 0.0.40
codegen_flags: <defaults>
</compile_context>

<pallas_src>
import numpy as np
import jax
import jax.numpy as jnp
from jax import lax
from jax.experimental import pallas as pl
from jax.experimental.pallas import tpu as pltpu

EPS = 1e-5


# ----------------------------------------------------------------------------
# Pallas kernel factory.  One grid step = one batch tile of `bt` examples whose
# (bt, Lout) rows are flattened onto the sublane axis.
# ----------------------------------------------------------------------------
def _make_kernel(stride, Lout, Cout, has_proj):
    def kernel(*refs):
        if has_proj:
            xg_ref, w1_ref, w2_ref, ws_ref, b_ref, out_ref, pad_ref = refs
        else:
            xg_ref, w1_ref, w2_ref, b_ref, out_ref, pad_ref = refs
            ws_ref = None

        bt = out_ref.shape[0]
        n = bt * Lout
        scin = xg_ref.shape[2]                      # = stride * Cin

        # Distinct sublane-shifted, batch-flattened windows of the padded input.
        # For stride=2 only two windows exist (taps 0/1 share one, tap 2 the other),
        # and the shortcut reuses one of them.
        cache = {}

        def window(q):
            if q not in cache:
                cache[q] = xg_ref[:, q:q + Lout, :].reshape(n, scin)
            return cache[q]

        # ---- conv1 (k=3, stride folded into lane-expanded weights) + BN1 bias + ReLU
        h1 = jnp.zeros((n, Cout), jnp.float32)
        for k in range(3):                           # static unroll over the 3 taps
            h1 = h1 + jnp.dot(window(k // stride), w1_ref[k],
                              preferred_element_type=jnp.float32)
        h1 = jnp.maximum(h1 + b_ref[0:1, :], 0.0)

        # ---- conv2 (k=3, stride=1, pad=1) + BN2 bias ----
        # h1 lives in a VMEM scratch with one zero halo row at each end; the two
        # shifted taps are unit-stride window reads of that scratch.
        zrow = jnp.zeros((1, Cout), jnp.float32)
        pad_ref[0:1, :] = zrow
        pad_ref[n + 1:n + 2, :] = zrow
        pad_ref[1:n + 1, :] = h1
        h_prev = pad_ref[0:n, :]                     # h1 shifted down by one row
        h_next = pad_ref[2:n + 2, :]                 # h1 shifted up by one row
        if bt > 1:
            # rows of different batch elements are adjacent -> zero the seams
            pos = lax.broadcasted_iota(jnp.int32, (bt, Lout, Cout), 1).reshape(n, Cout)
            h_prev = jnp.where(pos == 0, 0.0, h_prev)
            h_next = jnp.where(pos == Lout - 1, 0.0, h_next)
        h2 = (jnp.dot(h_prev, w2_ref[0], preferred_element_type=jnp.float32)
              + jnp.dot(h1, w2_ref[1], preferred_element_type=jnp.float32)
              + jnp.dot(h_next, w2_ref[2], preferred_element_type=jnp.float32)
              + b_ref[1:2, :])

        # ---- shortcut (projection matmul only when the module has one) ----
        xs = window(1 // stride)
        if has_proj:
            sc = jnp.dot(xs, ws_ref[...],
                         preferred_element_type=jnp.float32) + b_ref[2:3, :]
        else:
            sc = xs                                  # identity: stride==1, Cin==Cout

        # ---- residual add + ReLU ----
        out_ref[...] = jnp.maximum(h2 + sc, 0.0).reshape(bt, Lout, Cout).astype(out_ref.dtype)

    return kernel


# ----------------------------------------------------------------------------
# Wrapper: layout plumbing (transpose / pad / reshape), BN folding, pallas_call
# ----------------------------------------------------------------------------
def resnet_block_forward(x, params, stride):
    """x: (B, Cin, L) float32 (PyTorch NCL). Returns (B, Cout, Lout)."""
    B, Cin, L = x.shape
    Cout = int(params["w1"].shape[0])
    Lout = (L - 1) // stride + 1
    has_proj = bool(params["has_proj"])
    if not has_proj:
        assert stride == 1 and Cin == Cout, "identity shortcut needs stride==1, Cin==Cout"

    f32 = jnp.float32
    scin = stride * Cin
    G = -(-(L + 2) // stride)                        # ceil((L + 2) / stride)

    # fold BatchNorm (inference mode): scale -> weights, bias stays separate
    def fold(g, b, m, v):
        s = g / jnp.sqrt(v + EPS)
        return s, b - m * s

    s1, b1 = fold(params["g1"], params["be1"], params["m1"], params["v1"])
    s2, b2 = fold(params["g2"], params["be2"], params["m2"], params["v2"])

    # conv1 weights: torch (Cout, Cin, 3) -> (3, Cin, Cout), BN1 scale folded in,
    # then lane-expanded to (3, stride*Cin, Cout): tap k only has nonzero rows at
    # phase (k % stride), so the kernel never lane-slices the input.
    w1t = jnp.transpose(params["w1"], (2, 1, 0)).astype(f32) * s1[None, None, :]
    w1e = jnp.zeros((3, scin, Cout), f32)
    for k in range(3):
        r = k % stride
        w1e = w1e.at[k, r * Cin:(r + 1) * Cin, :].set(w1t[k])

    # conv2 weights: (3, Cout, Cout), BN2 scale folded in
    w2e = jnp.transpose(params["w2"], (2, 1, 0)).astype(f32) * s2[None, None, :]

    if has_proj:
        ss, bs = fold(params["gs"], params["bes"], params["ms"], params["vs"])
        wst = jnp.transpose(params["ws"][:, :, 0], (1, 0)).astype(f32) * ss[None, :]
        rs = 1 % stride
        wse = jnp.zeros((scin, Cout), f32).at[rs * Cin:(rs + 1) * Cin, :].set(wst)
        bias = jnp.stack([b1, b2, bs], axis=0).astype(f32)        # (3, Cout)
    else:
        bias = jnp.stack([b1, b2], axis=0).astype(f32)            # (2, Cout)
    nb = int(bias.shape[0])

    # layout: NCL -> NLC, pad length (conv halo + round up to a multiple of stride),
    # fold stride phase into the lane axis.  Pure transpose+pad+reshape: no gather,
    # no duplicated bytes.
    x_nlc = jnp.transpose(x, (0, 2, 1)).astype(f32)               # (B, L, Cin)
    extra = G * stride - (L + 2)
    x_pad = jnp.pad(x_nlc, ((0, 0), (1, 1 + extra), (0, 0)))      # (B, G*stride, Cin)
    xg = x_pad.reshape(B, G, scin)                                # (B, G, stride*Cin)

    # batch tile: largest divisor of B that fits a modest VMEM budget.  Collapsing
    # (bt, Lout) onto one sublane axis needs Lout to be sublane-aligned.
    if Lout % 8 == 0:
        per_b_bytes = 4 * (G * scin + 8 * Lout * max(Cout, scin))
        bt = max(1, min(B, (8 * 2 ** 20) // per_b_bytes))
        while B % bt:
            bt -= 1
    else:
        bt = 1

    in_specs = [
        pl.BlockSpec((bt, G, scin), lambda i: (i, 0, 0)),
        pl.BlockSpec((3, scin, Cout), lambda i: (0, 0, 0)),
        pl.BlockSpec((3, Cout, Cout), lambda i: (0, 0, 0)),
    ]
    args = [xg, w1e, w2e]
    if has_proj:
        in_specs.append(pl.BlockSpec((scin, Cout), lambda i: (0, 0)))
        args.append(wse)
    in_specs.append(pl.BlockSpec((nb, Cout), lambda i: (0, 0)))
    args.append(bias)

    flops = 2 * B * Lout * Cout * (3 * scin + 3 * Cout + (scin if has_proj else 0))
    bytes_accessed = 4 * (B * G * scin + 3 * scin * Cout + 3 * Cout * Cout
                          + (scin * Cout if has_proj else 0)
                          + nb * Cout + B * Lout * Cout)

    out = pl.pallas_call(
        _make_kernel(stride, Lout, Cout, has_proj),
        out_shape=jax.ShapeDtypeStruct((B, Lout, Cout), f32),
        grid=(B // bt,),
        in_specs=in_specs,
        out_specs=pl.BlockSpec((bt, Lout, Cout), lambda i: (i, 0, 0)),
        scratch_shapes=[pltpu.VMEM((bt * Lout + 2, Cout), f32)],
        compiler_params=pltpu.CompilerParams(dimension_semantics=("parallel",)),
        cost_estimate=pl.CostEstimate(flops=flops, transcendentals=0,
                                      bytes_accessed=bytes_accessed),
    )(*args)

    return jnp.transpose(out, (0, 2, 1)).astype(x.dtype)          # back to (B, Cout, Lout)


# ----------------------------------------------------------------------------
# Pure-JAX reference (mirrors the PyTorch forward in eval mode)
# ----------------------------------------------------------------------------
def resnet_block_reference(x, p, stride):
    dn = ("NCH", "OIH", "NCH")

    def bn(y, g, b, m, v):
        return (g[None, :, None] * (y - m[None, :, None])
                / jnp.sqrt(v[None, :, None] + EPS) + b[None, :, None])

    h = lax.conv_general_dilated(x, p["w1"], (stride,), ((1, 1),), dimension_numbers=dn)
    h = jax.nn.relu(bn(h, p["g1"], p["be1"], p["m1"], p["v1"]))
    h = lax.conv_general_dilated(h, p["w2"], (1,), ((1, 1),), dimension_numbers=dn)
    h = bn(h, p["g2"], p["be2"], p["m2"], p["v2"])
    if p["has_proj"]:
        sc = lax.conv_general_dilated(x, p["ws"], (stride,), ((0, 0),), dimension_numbers=dn)
        sc = bn(sc, p["gs"], p["bes"], p["ms"], p["vs"])
    else:
        sc = x
    return jax.nn.relu(h + sc)


def init_params(key, in_channels, out_channels, stride):
    ks = jax.random.split(key, 16)
    has_proj = (stride != 1) or (in_channels != out_channels)
    p = {
        "w1": 0.1 * jax.random.normal(ks[0], (out_channels, in_channels, 3), jnp.float32),
        "g1": jax.random.uniform(ks[1], (out_channels,), jnp.float32, 0.5, 1.5),
        "be1": 0.1 * jax.random.normal(ks[2], (out_channels,), jnp.float32),
        "m1": 0.1 * jax.random.normal(ks[3], (out_channels,), jnp.float32),
        "v1": jax.random.uniform(ks[4], (out_channels,), jnp.float32, 0.5, 1.5),
        "w2": 0.1 * jax.random.normal(ks[5], (out_channels, out_channels, 3), jnp.float32),
        "g2": jax.random.uniform(ks[6], (out_channels,), jnp.float32, 0.5, 1.5),
        "be2": 0.1 * jax.random.normal(ks[7], (out_channels,), jnp.float32),
        "m2": 0.1 * jax.random.normal(ks[8], (out_channels,), jnp.float32),
        "v2": jax.random.uniform(ks[9], (out_channels,), jnp.float32, 0.5, 1.5),
        "has_proj": has_proj,
    }
    if has_proj:
        p.update({
            "ws": 0.1 * jax.random.normal(ks[10], (out_channels, in_channels, 1), jnp.float32),
            "gs": jax.random.uniform(ks[11], (out_channels,), jnp.float32, 0.5, 1.5),
            "bes": 0.1 * jax.random.normal(ks[12], (out_channels,), jnp.float32),
            "ms": 0.1 * jax.random.normal(ks[13], (out_channels,), jnp.float32),
            "vs": jax.random.uniform(ks[14], (out_channels,), jnp.float32, 0.5, 1.5),
        })
    return p


if __name__ == "__main__":
    key = jax.random.PRNGKey(0)
    k_x1, k_p1, k_x2, k_p2 = jax.random.split(key, 4)

    # Case 1: projection shortcut exercised (stride=2, Cin != Cout).
    B, Cin, Cout, L, stride = 2, 4, 8, 16, 2
    x1 = jax.random.normal(k_x1, (B, Cin, L), jnp.float32)
    p1 = init_params(k_p1, Cin, Cout, stride)
    out1 = jax.block_until_ready(resnet_block_forward(x1, p1, stride))
    ref1 = jax.block_until_ready(resnet_block_reference(x1, p1, stride))
    assert out1.shape == ref1.shape, (out1.shape, ref1.shape)
    np.testing.assert_allclose(np.asarray(out1), np.asarray(ref1), atol=1e-4, rtol=1e-4)

    # Case 2: identity shortcut (stride=1, Cin == Cout) -> projection matmul is skipped.
    B2, C2, L2, stride2 = 2, 8, 16, 1
    x2 = jax.random.normal(k_x2, (B2, C2, L2), jnp.float32)
    p2 = init_params(k_p2, C2, C2, stride2)
    out2 = jax.block_until_ready(resnet_block_forward(x2, p2, stride2))
    ref2 = jax.block_until_ready(resnet_block_reference(x2, p2, stride2))
    assert out2.shape == ref2.shape, (out2.shape, ref2.shape)
    np.testing.assert_allclose(np.asarray(out2), np.asarray(ref2), atol=1e-4, rtol=1e-4)

    print("KERNEL_OK")
</pallas_src>

<mosaic_0001>
module attributes {stable_mosaic.version = 11 : i64} {
  func.func @kernel(%arg0: i32, %arg1: memref<2x9x8xf32, #tpu.memory_space<vmem>>, %arg2: memref<3x8x8xf32, #tpu.memory_space<vmem>>, %arg3: memref<3x8x8xf32, #tpu.memory_space<vmem>>, %arg4: memref<8x8xf32, #tpu.memory_space<vmem>>, %arg5: memref<3x8xf32, #tpu.memory_space<vmem>>, %arg6: memref<2x8x8xf32, #tpu.memory_space<vmem>>, %arg7: memref<18x8xf32, #tpu.memory_space<vmem>>) attributes {dimension_semantics = [#tpu.dimension_semantics<parallel>], iteration_bounds = array<i64: 1>, scalar_prefetch = 0 : i64, scratch_operands = 1 : i64, tpu.core_type = #tpu.core_type<tc>, window_params = [{transform_indices = @transform_0, window_bounds = array<i64: 2, 9, 8>}, {pipeline_mode = #tpu.pipeline_mode<synchronous>, transform_indices = @transform_1, window_bounds = array<i64: 3, 8, 8>}, {pipeline_mode = #tpu.pipeline_mode<synchronous>, transform_indices = @transform_2, window_bounds = array<i64: 3, 8, 8>}, {pipeline_mode = #tpu.pipeline_mode<synchronous>, transform_indices = @transform_3, window_bounds = array<i64: 8, 8>}, {pipeline_mode = #tpu.pipeline_mode<synchronous>, transform_indices = @transform_4, window_bounds = array<i64: 3, 8>}, {transform_indices = @transform_5, window_bounds = array<i64: 2, 8, 8>}]} {
    %cst = arith.constant 0.000000e+00 : f32
    %0 = vector.broadcast %cst : f32 to vector<16x8xf32>
    %c0 = arith.constant 0 : index
    %c0_0 = arith.constant 0 : index
    %c0_1 = arith.constant 0 : index
    %1 = vector.load %arg1[%c0, %c0_0, %c0_1] : memref<2x9x8xf32, #tpu.memory_space<vmem>>, vector<2x8x8xf32>
    %2 = vector.shape_cast %1 : vector<2x8x8xf32> to vector<16x8xf32>
    %c0_2 = arith.constant 0 : index
    %c0_3 = arith.constant 0 : index
    %c0_4 = arith.constant 0 : index
    %3 = vector.load %arg2[%c0_2, %c0_3, %c0_4] : memref<3x8x8xf32, #tpu.memory_space<vmem>>, vector<1x8x8xf32>
    %4 = vector.shape_cast %3 : vector<1x8x8xf32> to vector<8x8xf32>
    %cst_5 = arith.constant dense<0.000000e+00> : vector<16x8xf32>
    %5 = tpu.matmul %2, %4, %cst_5 {dimension_numbers = #tpu.dot_dimension_numbers<[1], [0], [0], [1], [0, 0, 1, 1], [], []>} : vector<16x8xf32>, vector<8x8xf32>, vector<16x8xf32> -> vector<16x8xf32>
    %6 = arith.addf %0, %5 : vector<16x8xf32>
    %c1 = arith.constant 1 : index
    %c0_6 = arith.constant 0 : index
    %c0_7 = arith.constant 0 : index
    %7 = vector.load %arg2[%c1, %c0_6, %c0_7] : memref<3x8x8xf32, #tpu.memory_space<vmem>>, vector<1x8x8xf32>
    %8 = vector.shape_cast %7 : vector<1x8x8xf32> to vector<8x8xf32>
    %cst_8 = arith.constant dense<0.000000e+00> : vector<16x8xf32>
    %9 = tpu.matmul %2, %8, %cst_8 {dimension_numbers = #tpu.dot_dimension_numbers<[1], [0], [0], [1], [0, 0, 1, 1], [], []>} : vector<16x8xf32>, vector<8x8xf32>, vector<16x8xf32> -> vector<16x8xf32>
    %10 = arith.addf %6, %9 : vector<16x8xf32>
    %c0_9 = arith.constant 0 : index
    %c1_10 = arith.constant 1 : index
    %c0_11 = arith.constant 0 : index
    %11 = vector.load %arg1[%c0_9, %c1_10, %c0_11] : memref<2x9x8xf32, #tpu.memory_space<vmem>>, vector<2x8x8xf32>
    %12 = vector.shape_cast %11 : vector<2x8x8xf32> to vector<16x8xf32>
    %c2 = arith.constant 2 : index
    %c0_12 = arith.constant 0 : index
    %c0_13 = arith.constant 0 : index
    %13 = vector.load %arg2[%c2, %c0_12, %c0_13] : memref<3x8x8xf32, #tpu.memory_space<vmem>>, vector<1x8x8xf32>
    %14 = vector.shape_cast %13 : vector<1x8x8xf32> to vector<8x8xf32>
    %cst_14 = arith.constant dense<0.000000e+00> : vector<16x8xf32>
    %15 = tpu.matmul %12, %14, %cst_14 {dimension_numbers = #tpu.dot_dimension_numbers<[1], [0], [0], [1], [0, 0, 1, 1], [], []>} : vector<16x8xf32>, vector<8x8xf32>, vector<16x8xf32> -> vector<16x8xf32>
    %16 = arith.addf %10, %15 : vector<16x8xf32>
    %c0_15 = arith.constant 0 : index
    %c0_16 = arith.constant 0 : index
    %17 = vector.load %arg5[%c0_15, %c0_16] : memref<3x8xf32, #tpu.memory_space<vmem>>, vector<1x8xf32>
    %18 = vector.broadcast %17 : vector<1x8xf32> to vector<16x8xf32>
    %19 = arith.addf %16, %18 : vector<16x8xf32>
    %cst_17 = arith.constant 0.000000e+00 : f32
    %20 = vector.broadcast %cst_17 : f32 to vector<16x8xf32>
    %21 = arith.maximumf %19, %20 : vector<16x8xf32>
    %cst_18 = arith.constant 0.000000e+00 : f32
    %22 = vector.broadcast %cst_18 : f32 to vector<1x8xf32>
    %c0_19 = arith.constant 0 : index
    %c0_20 = arith.constant 0 : index
    %23 = vector.load %arg7[%c0_19, %c0_20] : memref<18x8xf32, #tpu.memory_space<vmem>>, vector<1x8xf32>
    tpu.vector_store %arg7[%c0_19, %c0_20], %22 {strides = array<i32>} : memref<18x8xf32, #tpu.memory_space<vmem>>, vector<1x8xf32>,
    %c17 = arith.constant 17 : index
    %c0_21 = arith.constant 0 : index
    %24 = vector.load %arg7[%c17, %c0_21] : memref<18x8xf32, #tpu.memory_space<vmem>>, vector<1x8xf32>
    tpu.vector_store %arg7[%c17, %c0_21], %22 {strides = array<i32>} : memref<18x8xf32, #tpu.memory_space<vmem>>, vector<1x8xf32>,
    %c1_22 = arith.constant 1 : index
    %c0_23 = arith.constant 0 : index
    %25 = vector.load %arg7[%c1_22, %c0_23] : memref<18x8xf32, #tpu.memory_space<vmem>>, vector<16x8xf32>
    tpu.vector_store %arg7[%c1_22, %c0_23], %21 {strides = array<i32>} : memref<18x8xf32, #tpu.memory_space<vmem>>, vector<16x8xf32>,
    %c0_24 = arith.constant 0 : index
    %c0_25 = arith.constant 0 : index
    %26 = vector.load %arg7[%c0_24, %c0_25] : memref<18x8xf32, #tpu.memory_space<vmem>>, vector<16x8xf32>
    %c2_26 = arith.constant 2 : index
    %c0_27 = arith.constant 0 : index
    %27 = vector.load %arg7[%c2_26, %c0_27] : memref<18x8xf32, #tpu.memory_space<vmem>>, vector<16x8xf32>
    %28 = tpu.iota {dimensions = array<i32: 1>} : vector<2x8x8xi32>
    %29 = vector.shape_cast %28 : vector<2x8x8xi32> to vector<16x8xi32>
    %c0_i32 = arith.constant 0 : i32
    %30 = vector.broadcast %c0_i32 : i32 to vector<16x8xi32>
    %31 = arith.cmpi eq, %29, %30 : vector<16x8xi32>
    %cst_28 = arith.constant 0.000000e+00 : f32
    %32 = vector.broadcast %cst_28 : f32 to vector<16x8xf32>
    %33 = arith.select %31, %32, %26 : vector<16x8xi1>, vector<16x8xf32>
    %c7_i32 = arith.constant 7 : i32
    %34 = vector.broadcast %c7_i32 : i32 to vector<16x8xi32>
    %35 = arith.cmpi eq, %29, %34 : vector<16x8xi32>
    %cst_29 = arith.constant 0.000000e+00 : f32
    %36 = vector.broadcast %cst_29 : f32 to vector<16x8xf32>
    %37 = arith.select %35, %36, %27 : vector<16x8xi1>, vector<16x8xf32>
    %c0_30 = arith.constant 0 : index
    %c0_31 = arith.constant 0 : index
    %c0_32 = arith.constant 0 : index
    %38 = vector.load %arg3[%c0_30, %c0_31, %c0_32] : memref<3x8x8xf32, #tpu.memory_space<vmem>>, vector<1x8x8xf32>
    %39 = vector.shape_cast %38 : vector<1x8x8xf32> to vector<8x8xf32>
    %cst_33 = arith.constant dense<0.000000e+00> : vector<16x8xf32>
    %40 = tpu.matmul %33, %39, %cst_33 {dimension_numbers = #tpu.dot_dimension_numbers<[1], [0], [0], [1], [0, 0, 1, 1], [], []>} : vector<16x8xf32>, vector<8x8xf32>, vector<16x8xf32> -> vector<16x8xf32>
    %c1_34 = arith.constant 1 : index
    %c0_35 = arith.constant 0 : index
    %c0_36 = arith.constant 0 : index
    %41 = vector.load %arg3[%c1_34, %c0_35, %c0_36] : memref<3x8x8xf32, #tpu.memory_space<vmem>>, vector<1x8x8xf32>
    %42 = vector.shape_cast %41 : vector<1x8x8xf32> to vector<8x8xf32>
    %cst_37 = arith.constant dense<0.000000e+00> : vector<16x8xf32>
    %43 = tpu.matmul %21, %42, %cst_37 {dimension_numbers = #tpu.dot_dimension_numbers<[1], [0], [0], [1], [0, 0, 1, 1], [], []>} : vector<16x8xf32>, vector<8x8xf32>, vector<16x8xf32> -> vector<16x8xf32>
    %44 = arith.addf %40, %43 : vector<16x8xf32>
    %c2_38 = arith.constant 2 : index
    %c0_39 = arith.constant 0 : index
    %c0_40 = arith.constant 0 : index
    %45 = vector.load %arg3[%c2_38, %c0_39, %c0_40] : memref<3x8x8xf32, #tpu.memory_space<vmem>>, vector<1x8x8xf32>
    %46 = vector.shape_cast %45 : vector<1x8x8xf32> to vector<8x8xf32>
    %cst_41 = arith.constant dense<0.000000e+00> : vector<16x8xf32>
    %47 = tpu.matmul %37, %46, %cst_41 {dimension_numbers = #tpu.dot_dimension_numbers<[1], [0], [0], [1], [0, 0, 1, 1], [], []>} : vector<16x8xf32>, vector<8x8xf32>, vector<16x8xf32> -> vector<16x8xf32>
    %48 = arith.addf %44, %47 : vector<16x8xf32>
    %c1_42 = arith.constant 1 : index
    %c0_43 = arith.constant 0 : index
    %49 = vector.load %arg5[%c1_42, %c0_43] : memref<3x8xf32, #tpu.memory_space<vmem>>, vector<1x8xf32>
    %50 = vector.broadcast %49 : vector<1x8xf32> to vector<16x8xf32>
    %51 = arith.addf %48, %50 : vector<16x8xf32>
    %c0_44 = arith.constant 0 : index
    %c0_45 = arith.constant 0 : index
    %52 = vector.load %arg4[%c0_44, %c0_45] : memref<8x8xf32, #tpu.memory_space<vmem>>, vector<8x8xf32>
    %cst_46 = arith.constant dense<0.000000e+00> : vector<16x8xf32>
    %53 = tpu.matmul %2, %52, %cst_46 {dimension_numbers = #tpu.dot_dimension_numbers<[1], [0], [0], [1], [0, 0, 1, 1], [], []>} : vector<16x8xf32>, vector<8x8xf32>, vector<16x8xf32> -> vector<16x8xf32>
    %c2_47 = arith.constant 2 : index
    %c0_48 = arith.constant 0 : index
    %54 = vector.load %arg5[%c2_47, %c0_48] : memref<3x8xf32, #tpu.memory_space<vmem>>, vector<1x8xf32>
    %55 = vector.broadcast %54 : vector<1x8xf32> to vector<16x8xf32>
    %56 = arith.addf %53, %55 : vector<16x8xf32>
    %57 = arith.addf %51, %56 : vector<16x8xf32>
    %cst_49 = arith.constant 0.000000e+00 : f32
    %58 = vector.broadcast %cst_49 : f32 to vector<16x8xf32>
    %59 = arith.maximumf %57, %58 : vector<16x8xf32>
    %60 = vector.shape_cast %59 : vector<16x8xf32> to vector<2x8x8xf32>
    %c0_50 = arith.constant 0 : index
    %c0_51 = arith.constant 0 : index
    %c0_52 = arith.constant 0 : index
    %61 = vector.load %arg6[%c0_50, %c0_51, %c0_52] : memref<2x8x8xf32, #tpu.memory_space<vmem>>, vector<2x8x8xf32>
    tpu.vector_store %arg6[%c0_50, %c0_51, %c0_52], %60 {strides = array<i32>} : memref<2x8x8xf32, #tpu.memory_space<vmem>>, vector<2x8x8xf32>,
    return
  }
  func.func @transform_0(%arg0: i32) -> (i32, i32, i32) {
    %c0_i32 = arith.constant 0 : i32
    %c0_i32_0 = arith.constant 0 : i32
    %c0_i32_1 = arith.constant 0 : i32
    return %arg0, %c0_i32, %c0_i32_0 : i32, i32, i32
  }
  func.func @transform_1(%arg0: i32) -> (i32, i32, i32) {
    %c0_i32 = arith.constant 0 : i32
    %c0_i32_0 = arith.constant 0 : i32
    %c0_i32_1 = arith.constant 0 : i32
    %c0_i32_2 = arith.constant 0 : i32
    return %c0_i32, %c0_i32_0, %c0_i32_1 : i32, i32, i32
  }
  func.func @transform_2(%arg0: i32) -> (i32, i32, i32) {
    %c0_i32 = arith.constant 0 : i32
    %c0_i32_0 = arith.constant 0 : i32
    %c0_i32_1 = arith.constant 0 : i32
    %c0_i32_2 = arith.constant 0 : i32
    return %c0_i32, %c0_i32_0, %c0_i32_1 : i32, i32, i32
  }
  func.func @transform_3(%arg0: i32) -> (i32, i32) {
    %c0_i32 = arith.constant 0 : i32
    %c0_i32_0 = arith.constant 0 : i32
    %c0_i32_1 = arith.constant 0 : i32
    return %c0_i32, %c0_i32_0 : i32, i32
  }
  func.func @transform_4(%arg0: i32) -> (i32, i32) {
    %c0_i32 = arith.constant 0 : i32
    %c0_i32_0 = arith.constant 0 : i32
    %c0_i32_1 = arith.constant 0 : i32
    return %c0_i32, %c0_i32_0 : i32, i32
  }
  func.func @transform_5(%arg0: i32) -> (i32, i32, i32) {
    %c0_i32 = arith.constant 0 : i32
    %c0_i32_0 = arith.constant 0 : i32
    %c0_i32_1 = arith.constant 0 : i32
    return %arg0, %c0_i32, %c0_i32_0 : i32, i32, i32
  }
}

</mosaic_0001>

<llo_original>
// kernel: tpu_custom_call.1
$region0: #{tpu_custom_call.1}
  #allocation0 [shape = 'u32[]', space=smem, size = 0x4, offset = 0x4, fixed_abs, tag = 'smem constant byte address 0x4 - core index']
  #allocation1 [shape = 'u32[144,128]{1,0:T(1,128)}', space=vmem, size = 0x12000, scoped, tag = 'internal scratch']
  #allocation2 [shape = 'f32[18,8]{1,0:T(8,128)}', space=vmem, size = 0x3000, scoped, tag = 'scratch operand']
  %s0 = inlined_call_operand.vmem [shape: f32[2,9,8], index: 0, kind: input, shape index: {}]
  %s1 = inlined_call_operand.vmem [shape: f32[3,8,8], index: 1, kind: input, shape index: {}]
  %s2 = inlined_call_operand.vmem [shape: f32[3,8,8], index: 2, kind: input, shape index: {}]
  %s3 = inlined_call_operand.vmem [shape: f32[8,8], index: 3, kind: input, shape index: {}]
  %s4 = inlined_call_operand.vmem [shape: f32[3,8], index: 4, kind: input, shape index: {}]
  %s5 = inlined_call_operand.hbm [shape: f32[2,8,8], index: 5, kind: output, shape index: {}]
  %s6 = sld [smem:[#allocation0]]
  $region30: #{tpu_custom_call.1} parent=0
    _
  %s8 = ssub.s32 1, %s6
  %s9 = scalar_select 0, %s8, %s6
  $region1: #{tpu_custom_call.1} parent=0
    #allocation3 [shape = 'u8[8192]{0}', space=vmem, size = 0x2000, scoped, tag = 'output window, operand 0, single buffered']
    #allocation4 [shape = 's32[1]{0}', space=sflag, size = 0x4, scoped, tag = 'scoped memory for tpu_custom_call.1']
    %10 = vsyncpa [#allocation4], 0
    // Predicated region
    $region2: #{tpu_custom_call.1} parent=1 // pred_check
      _
    $region3: #{tpu_custom_call.1} parent=1 // pred_check_branch
      %12 = sbr.rel (0) target = $region5
    $region4: #{tpu_custom_call.1} parent=1 // pred_region
      _
    $region5: #{tpu_custom_call.1} parent=1 // pred_fallthru
      _
    // Predicated region
    $region6: #{tpu_custom_call.1} parent=1 // pred_check
      _
    $region7: #{tpu_custom_call.1} parent=1 // pred_check_branch
      %14 = sbr.rel (0) target = $region9
    $region8: #{tpu_custom_call.1} parent=1 // pred_region
      _
    $region9: #{tpu_custom_call.1} parent=1 // pred_fallthru
      _
    // Predicated region
    $region10: #{tpu_custom_call.1} parent=1 // pred_check
      _
    $region11: #{tpu_custom_call.1} parent=1 // pred_check_branch
      %16 = sbr.rel (0) target = $region13
    $region12: #{tpu_custom_call.1} parent=1 // pred_region
      _
    $region13: #{tpu_custom_call.1} parent=1 // pred_fallthru
      _
    // Predicated region
    $region14: #{tpu_custom_call.1} parent=1 // pred_check
      _
    $region15: #{tpu_custom_call.1} parent=1 // pred_check_branch
      %18 = sbr.rel (0) target = $region17
    $region16: #{tpu_custom_call.1} parent=1 // pred_region
      _
    $region17: #{tpu_custom_call.1} parent=1 // pred_fallthru
      _
    // Predicated region
    $region18: #{tpu_custom_call.1} parent=1 // pred_check
      _
    $region19: #{tpu_custom_call.1} parent=1 // pred_check_branch
      %20 = sbr.rel (0) target = $region21
    $region20: #{tpu_custom_call.1} parent=1 // pred_region
      _
    $region21: #{tpu_custom_call.1} parent=1 // pred_fallthru
      _
    %v21 = vld [vmem:[%s0] sm:$0xff]
    %v22 = vld [vmem:[%s0 + $0x10] sm:$0xff]
    %v23 = vld [vmem:[%s1] sm:$0xff]
    %s24 = scalar_lea.vmem %s1, 8
    %v25 = vld [vmem:[%s24] sm:$0xff]
    %vm26 = vcmask 64512
    %v28 = vsel %vm26, %v21, 0
    %v31 = vsel %vm26, %v22, 0
    %33 = vmatprep.subr.mxu0 0.0
    %34 = vmatpush1.msra.mxu0 %v25
    %35 = vmatprep.subr.mxu0 0.0
    %36 = vmatpush1.msra.mxu0 0.0
    %37 = vmatprep.subr.mxu0 0.0
    %38 = vmatpush1.msra.mxu0 0.0
    %39 = vmatprep.subr.mxu0 0.0
    %40 = vmatpush1.msra.mxu0 0.0
    %41 = vmatprep.subr.mxu0 0.0
    %42 = vmatpush1.msra.mxu0 0.0
    %43 = vmatprep.subr.mxu0 0.0
    %44 = vmatpush1.msra.mxu0 0.0
    %45 = vmatprep.subr.mxu0 0.0
    %46 = vmatpush1.msra.mxu0 0.0
    %47 = vmatprep.subr.mxu0 0.0
    %48 = vmatpush1.msra.mxu0 0.0
    %49 = vmatprep.subr.mxu0 0.0
    %50 = vmatpush1.msra.mxu0 0.0
    %51 = vmatprep.subr.mxu0 0.0
    %52 = vmatpush1.msra.mxu0 0.0
    %53 = vmatprep.subr.mxu0 0.0
    %54 = vmatpush1.msra.mxu0 0.0
    %55 = vmatprep.subr.mxu0 0.0
    %56 = vmatpush1.msra.mxu0 0.0
    %57 = vmatprep.subr.mxu0 0.0
    %58 = vmatpush1.msra.mxu0 0.0
    %59 = vmatprep.subr.mxu0 0.0
    %60 = vmatpush1.msra.mxu0 0.0
    %61 = vmatprep.subr.mxu0 0.0
    %62 = vmatpush1.msra.mxu0 0.0
    %63 = vmatprep.subr.mxu0 0.0
    %64 = vmatpush1.msra.mxu0 0.0
    %65 = vmatprep.subr.mxu0 0.0
    %66 = vmatpush1.msra.mxu0 0.0
    %67 = vmatprep.subr.mxu0 0.0
    %68 = vmatpush1.msra.mxu0 0.0
    %69 = vmatprep.subr.mxu0 0.0
    %70 = vmatpush1.msra.mxu0 0.0
    %71 = vmatprep.subr.mxu0 0.0
    %72 = vmatpush1.msra.mxu0 0.0
    %73 = vmatprep.subr.mxu0 0.0
    %74 = vmatpush1.msra.mxu0 0.0
    %75 = vmatprep.subr.mxu0 0.0
    %76 = vmatpush1.msra.mxu0 0.0
    %77 = vmatprep.subr.mxu0 0.0
    %78 = vmatpush1.msra.mxu0 0.0
    %79 = vmatprep.subr.mxu0 0.0
    %80 = vmatpush1.msra.mxu0 0.0
    %81 = vmatprep.subr.mxu0 0.0
    %82 = vmatpush1.msra.mxu0 0.0
    %83 = vmatprep.subr.mxu0 0.0
    %84 = vmatpush1.msra.mxu0 0.0
    %85 = vmatprep.subr.mxu0 0.0
    %86 = vmatpush1.msra.mxu0 0.0
    %87 = vmatprep.subr.mxu0 0.0
    %88 = vmatpush1.msra.mxu0 0.0
    %89 = vmatprep.subr.mxu0 0.0
    %90 = vmatpush1.msra.mxu0 0.0
    %91 = vmatprep.subr.mxu0 0.0
    %92 = vmatpush1.msra.mxu0 0.0
    %93 = vmatprep.subr.mxu0 0.0
    %94 = vmatpush1.msra.mxu0 0.0
    %95 = vmatprep.subr.mxu0 0.0
    %96 = vmatpush1.msra.mxu0 0.0
    %97 = vmatprep.mubr.f32.mxu0 0.0
    %98 = vmatmul.mubr.f32.gmra.mrb[0].mxu0 %v28
    %v99 = vpop.f32.mrb[0].mxu0
    %v100 = vadd.f32 0.0, %v99
    %v101 = vpop.f32.mrb[0].mxu0
    %102 = vmatprep.mubr.f32.mxu0 0.0
    %103 = vmatmul.mubr.f32.gmra.mrb[0].mxu0 %v31
    %v104 = vpop.f32.mrb[0].mxu0
    %v105 = vadd.f32 0.0, %v104
    %v106 = vpop.f32.mrb[0].mxu0
    %107 = vdwg.mxu0
    %108 = vmatprep.subr.mxu0 0.0
    %109 = vmatpush1.msra.mxu0 %v23
    %110 = vmatprep.subr.mxu0 0.0
    %111 = vmatpush1.msra.mxu0 0.0
    %112 = vmatprep.subr.mxu0 0.0
    %113 = vmatpush1.msra.mxu0 0.0
    %114 = vmatprep.subr.mxu0 0.0
    %115 = vmatpush1.msra.mxu0 0.0
    %116 = vmatprep.subr.mxu0 0.0
    %117 = vmatpush1.msra.mxu0 0.0
    %118 = vmatprep.subr.mxu0 0.0
    %119 = vmatpush1.msra.mxu0 0.0
    %120 = vmatprep.subr.mxu0 0.0
    %121 = vmatpush1.msra.mxu0 0.0
    %122 = vmatprep.subr.mxu0 0.0
    %123 = vmatpush1.msra.mxu0 0.0
    %124 = vmatprep.subr.mxu0 0.0
    %125 = vmatpush1.msra.mxu0 0.0
    %126 = vmatprep.subr.mxu0 0.0
    %127 = vmatpush1.msra.mxu0 0.0
    %128 = vmatprep.subr.mxu0 0.0
    %129 = vmatpush1.msra.mxu0 0.0
    %130 = vmatprep.subr.mxu0 0.0
    %131 = vmatpush1.msra.mxu0 0.0
    %132 = vmatprep.subr.mxu0 0.0
    %133 = vmatpush1.msra.mxu0 0.0
    %134 = vmatprep.subr.mxu0 0.0
    %135 = vmatpush1.msra.mxu0 0.0
    %136 = vmatprep.subr.mxu0 0.0
    %137 = vmatpush1.msra.mxu0 0.0
    %138 = vmatprep.subr.mxu0 0.0
    %139 = vmatpush1.msra.mxu0 0.0
    %140 = vmatprep.subr.mxu0 0.0
    %141 = vmatpush1.msra.mxu0 0.0
    %142 = vmatprep.subr.mxu0 0.0
    %143 = vmatpush1.msra.mxu0 0.0
    %144 = vmatprep.subr.mxu0 0.0
    %145 = vmatpush1.msra.mxu0 0.0
    %146 = vmatprep.subr.mxu0 0.0
    %147 = vmatpush1.msra.mxu0 0.0
    %148 = vmatprep.subr.mxu0 0.0
    %149 = vmatpush1.msra.mxu0 0.0
    %150 = vmatprep.subr.mxu0 0.0
    %151 = vmatpush1.msra.mxu0 0.0
    %152 = vmatprep.subr.mxu0 0.0
    %153 = vmatpush1.msra.mxu0 0.0
    %154 = vmatprep.subr.mxu0 0.0
    %155 = vmatpush1.msra.mxu0 0.0
    %156 = vmatprep.subr.mxu0 0.0
    %157 = vmatpush1.msra.mxu0 0.0
    %158 = vmatprep.subr.mxu0 0.0
    %159 = vmatpush1.msra.mxu0 0.0
    %160 = vmatprep.subr.mxu0 0.0
    %161 = vmatpush1.msra.mxu0 0.0
    %162 = vmatprep.subr.mxu0 0.0
    %163 = vmatpush1.msra.mxu0 0.0
    %164 = vmatprep.subr.mxu0 0.0
    %165 = vmatpush1.msra.mxu0 0.0
    %166 = vmatprep.subr.mxu0 0.0
    %167 = vmatpush1.msra.mxu0 0.0
    %168 = vmatprep.subr.mxu0 0.0
    %169 = vmatpush1.msra.mxu0 0.0
    %170 = vmatprep.subr.mxu0 0.0
    %171 = vmatpush1.msra.mxu0 0.0
    %172 = vmatprep.mubr.f32.mxu0 0.0
    %173 = vmatmul.mubr.f32.gmra.mrb[0].mxu0 %v28
    %v174 = vpop.f32.mrb[0].mxu0
    %v175 = vadd.f32 %v100, %v174
    %v176 = vpop.f32.mrb[0].mxu0
    %177 = vmatprep.mubr.f32.mxu0 0.0
    %178 = vmatmul.mubr.f32.gmra.mrb[0].mxu0 %v31
    %v179 = vpop.f32.mrb[0].mxu0
    %v180 = vadd.f32 %v105, %v179
    %v181 = vpop.f32.mrb[0].mxu0
    %182 = vdwg.mxu0
    %v183 = vld [vmem:[%s0 + $0x1] sm:$0xff]
    %v184 = vld [vmem:[%s0 + $0x11] sm:$0xff]
    %s185 = scalar_lea.vmem %s1, 16
    %v186 = vld [vmem:[%s185] sm:$0xff]
    %v188 = vsel %vm26, %v183, 0
    %v191 = vsel %vm26, %v184, 0
    %193 = vmatprep.subr.mxu0 0.0
    %194 = vmatpush1.msra.mxu0 %v186
    %195 = vmatprep.subr.mxu0 0.0
    %196 = vmatpush1.msra.mxu0 0.0
    %197 = vmatprep.subr.mxu0 0.0
    %198 = vmatpush1.msra.mxu0 0.0
    %199 = vmatprep.subr.mxu0 0.0
    %200 = vmatpush1.msra.mxu0 0.0
    %201 = vmatprep.subr.mxu0 0.0
    %202 = vmatpush1.msra.mxu0 0.0
    %203 = vmatprep.subr.mxu0 0.0
    %204 = vmatpush1.msra.mxu0 0.0
    %205 = vmatprep.subr.mxu0 0.0
    %206 = vmatpush1.msra.mxu0 0.0
    %207 = vmatprep.subr.mxu0 0.0
    %208 = vmatpush1.msra.mxu0 0.0
    %209 = vmatprep.subr.mxu0 0.0
    %210 = vmatpush1.msra.mxu0 0.0
    %211 = vmatprep.subr.mxu0 0.0
    %212 = vmatpush1.msra.mxu0 0.0
    %213 = vmatprep.subr.mxu0 0.0
    %214 = vmatpush1.msra.mxu0 0.0
    %215 = vmatprep.subr.mxu0 0.0
    %216 = vmatpush1.msra.mxu0 0.0
    %217 = vmatprep.subr.mxu0 0.0
    %218 = vmatpush1.msra.mxu0 0.0
    %219 = vmatprep.subr.mxu0 0.0
    %220 = vmatpush1.msra.mxu0 0.0
    %221 = vmatprep.subr.mxu0 0.0
    %222 = vmatpush1.msra.mxu0 0.0
    %223 = vmatprep.subr.mxu0 0.0
    %224 = vmatpush1.msra.mxu0 0.0
    %225 = vmatprep.subr.mxu0 0.0
    %226 = vmatpush1.msra.mxu0 0.0
    %227 = vmatprep.subr.mxu0 0.0
    %228 = vmatpush1.msra.mxu0 0.0
    %229 = vmatprep.subr.mxu0 0.0
    %230 = vmatpush1.msra.mxu0 0.0
    %231 = vmatprep.subr.mxu0 0.0
    %232 = vmatpush1.msra.mxu0 0.0
    %233 = vmatprep.subr.mxu0 0.0
    %234 = vmatpush1.msra.mxu0 0.0
    %235 = vmatprep.subr.mxu0 0.0
    %236 = vmatpush1.msra.mxu0 0.0
    %237 = vmatprep.subr.mxu0 0.0
    %238 = vmatpush1.msra.mxu0 0.0
    %239 = vmatprep.subr.mxu0 0.0
    %240 = vmatpush1.msra.mxu0 0.0
    %241 = vmatprep.subr.mxu0 0.0
    %242 = vmatpush1.msra.mxu0 0.0
    %243 = vmatprep.subr.mxu0 0.0
    %244 = vmatpush1.msra.mxu0 0.0
    %245 = vmatprep.subr.mxu0 0.0
    %246 = vmatpush1.msra.mxu0 0.0
    %247 = vmatprep.subr.mxu0 0.0
    %248 = vmatpush1.msra.mxu0 0.0
    %249 = vmatprep.subr.mxu0 0.0
    %250 = vmatpush1.msra.mxu0 0.0
    %251 = vmatprep.subr.mxu0 0.0
    %252 = vmatpush1.msra.mxu0 0.0
    %253 = vmatprep.subr.mxu0 0.0
    %254 = vmatpush1.msra.mxu0 0.0
    %255 = vmatprep.subr.mxu0 0.0
    %256 = vmatpush1.msra.mxu0 0.0
    %257 = vmatprep.mubr.f32.mxu0 0.0
    %258 = vmatmul.mubr.f32.gmra.mrb[0].mxu0 %v188
    %v259 = vpop.f32.mrb[0].mxu0
    %v260 = vadd.f32 0.0, %v259
    %v261 = vpop.f32.mrb[0].mxu0
    %262 = vmatprep.mubr.f32.mxu0 0.0
    %263 = vmatmul.mubr.f32.gmra.mrb[0].mxu0 %v191
    %v264 = vpop.f32.mrb[0].mxu0
    %v265 = vadd.f32 0.0, %v264
    %v266 = vpop.f32.mrb[0].mxu0
    %267 = vdwg.mxu0
    %v268 = vadd.f32 %v175, %v260
    %v269 = vadd.f32 %v180, %v265
    %v270 = vld [vmem:[%s4] sm:$0x1]
    %v271 = vlaneseq
    %v272 = vshrl.u32 %v271, 7
    %v273 = vsub.s32 0, %v272
    %v274 = vrot.slane %v270, %v273
    %v275 = vadd.f32 %v268, %v274
    %v276 = vadd.f32 %v269, %v274
    %v277 = vmax.f32 %v275, 0.0
    %v278 = vmax.f32 %v276, 0.0
    %vm279 = vcmask 57344
    %280 = vst.msk [vmem:[#allocation2] sm:$0x1] %vm279, 0.0
    %281 = vst.msk [vmem:[#allocation2 + $0x11] sm:$0x1] %vm279, 0.0
    %282 = vst.msk [vmem:[#allocation2 + $0x1] sm:$0xff] %vm26, %v277
    %283 = vst.msk [vmem:[#allocation2 + $0x9] sm:$0xff] %vm26, %v278
    %v284 = vld [vmem:[#allocation2] sm:$0xff]
    %v285 = vld [vmem:[#allocation2 + $0x8] sm:$0xff]
    %v286 = vld [vmem:[#allocation2 + $0x2] sm:$0xff]
    %v287 = vld [vmem:[#allocation2 + $0xa] sm:$0xff]
    %v288 = vlaneseq
    %v289 = vshrl.u32 %v288, 7
    %vm290 = vcmp.eq.s32.totalorder %v289, 0
    %v291 = vsel %vm290, 0.0, %v284
    %v292 = vsel %vm290, 0.0, %v285
    %vm293 = vcmp.eq.s32.totalorder %v289, 7
    %v294 = vsel %vm293, 0.0, %v286
    %v295 = vsel %vm293, 0.0, %v287
    %v296 = vld [vmem:[%s2] sm:$0xff]
    %s297 = scalar_lea.vmem %s2, 8
    %v298 = vld [vmem:[%s297] sm:$0xff]
    %v300 = vsel %vm26, %v277, 0
    %v303 = vsel %vm26, %v278, 0
    %305 = vmatprep.subr.mxu0 0.0
    %306 = vmatpush1.msra.mxu0 %v298
    %307 = vmatprep.subr.mxu0 0.0
    %308 = vmatpush1.msra.mxu0 0.0
    %309 = vmatprep.subr.mxu0 0.0
    %310 = vmatpush1.msra.mxu0 0.0
    %311 = vmatprep.subr.mxu0 0.0
    %312 = vmatpush1.msra.mxu0 0.0
    %313 = vmatprep.subr.mxu0 0.0
    %314 = vmatpush1.msra.mxu0 0.0
    %315 = vmatprep.subr.mxu0 0.0
    %316 = vmatpush1.msra.mxu0 0.0
    %317 = vmatprep.subr.mxu0 0.0
    %318 = vmatpush1.msra.mxu0 0.0
    %319 = vmatprep.subr.mxu0 0.0
    %320 = vmatpush1.msra.mxu0 0.0
    %321 = vmatprep.subr.mxu0 0.0
    %322 = vmatpush1.msra.mxu0 0.0
    %323 = vmatprep.subr.mxu0 0.0
    %324 = vmatpush1.msra.mxu0 0.0
    %325 = vmatprep.subr.mxu0 0.0
    %326 = vmatpush1.msra.mxu0 0.0
    %327 = vmatprep.subr.mxu0 0.0
    %328 = vmatpush1.msra.mxu0 0.0
    %329 = vmatprep.subr.mxu0 0.0
    %330 = vmatpush1.msra.mxu0 0.0
    %331 = vmatprep.subr.mxu0 0.0
    %332 = vmatpush1.msra.mxu0 0.0
    %333 = vmatprep.subr.mxu0 0.0
    %334 = vmatpush1.msra.mxu0 0.0
    %335 = vmatprep.subr.mxu0 0.0
    %336 = vmatpush1.msra.mxu0 0.0
    %337 = vmatprep.subr.mxu0 0.0
    %338 = vmatpush1.msra.mxu0 0.0
    %339 = vmatprep.subr.mxu0 0.0
    %340 = vmatpush1.msra.mxu0 0.0
    %341 = vmatprep.subr.mxu0 0.0
    %342 = vmatpush1.msra.mxu0 0.0
    %343 = vmatprep.subr.mxu0 0.0
    %344 = vmatpush1.msra.mxu0 0.0
    %345 = vmatprep.subr.mxu0 0.0
    %346 = vmatpush1.msra.mxu0 0.0
    %347 = vmatprep.subr.mxu0 0.0
    %348 = vmatpush1.msra.mxu0 0.0
    %349 = vmatprep.subr.mxu0 0.0
    %350 = vmatpush1.msra.mxu0 0.0
    %351 = vmatprep.subr.mxu0 0.0
    %352 = vmatpush1.msra.mxu0 0.0
    %353 = vmatprep.subr.mxu0 0.0
    %354 = vmatpush1.msra.mxu0 0.0
    %355 = vmatprep.subr.mxu0 0.0
    %356 = vmatpush1.msra.mxu0 0.0
    %357 = vmatprep.subr.mxu0 0.0
    %358 = vmatpush1.msra.mxu0 0.0
    %359 = vmatprep.subr.mxu0 0.0
    %360 = vmatpush1.msra.mxu0 0.0
    %361 = vmatprep.subr.mxu0 0.0
    %362 = vmatpush1.msra.mxu0 0.0
    %363 = vmatprep.subr.mxu0 0.0
    %364 = vmatpush1.msra.mxu0 0.0
    %365 = vmatprep.subr.mxu0 0.0
    %366 = vmatpush1.msra.mxu0 0.0
    %367 = vmatprep.subr.mxu0 0.0
    %368 = vmatpush1.msra.mxu0 0.0
    %369 = vmatprep.mubr.f32.mxu0 0.0
    %370 = vmatmul.mubr.f32.gmra.mrb[0].mxu0 %v300
    %v371 = vpop.f32.mrb[0].mxu0
    %v372 = vadd.f32 0.0, %v371
    %v373 = vpop.f32.mrb[0].mxu0
    %374 = vmatprep.mubr.f32.mxu0 0.0
    %375 = vmatmul.mubr.f32.gmra.mrb[0].mxu0 %v303
    %v376 = vpop.f32.mrb[0].mxu0
    %v377 = vadd.f32 0.0, %v376
    %v378 = vpop.f32.mrb[0].mxu0
    %379 = vdwg.mxu0
    %v381 = vsel %vm26, %v291, 0
    %v384 = vsel %vm26, %v292, 0
    %386 = vmatprep.subr.mxu0 0.0
    %387 = vmatpush1.msra.mxu0 %v296
    %388 = vmatprep.subr.mxu0 0.0
    %389 = vmatpush1.msra.mxu0 0.0
    %390 = vmatprep.subr.mxu0 0.0
    %391 = vmatpush1.msra.mxu0 0.0
    %392 = vmatprep.subr.mxu0 0.0
    %393 = vmatpush1.msra.mxu0 0.0
    %394 = vmatprep.subr.mxu0 0.0
    %395 = vmatpush1.msra.mxu0 0.0
    %396 = vmatprep.subr.mxu0 0.0
    %397 = vmatpush1.msra.mxu0 0.0
    %398 = vmatprep.subr.mxu0 0.0
    %399 = vmatpush1.msra.mxu0 0.0
    %400 = vmatprep.subr.mxu0 0.0
    %401 = vmatpush1.msra.mxu0 0.0
    %402 = vmatprep.subr.mxu0 0.0
    %403 = vmatpush1.msra.mxu0 0.0
    %404 = vmatprep.subr.mxu0 0.0
    %405 = vmatpush1.msra.mxu0 0.0
    %406 = vmatprep.subr.mxu0 0.0
    %407 = vmatpush1.msra.mxu0 0.0
    %408 = vmatprep.subr.mxu0 0.0
    %409 = vmatpush1.msra.mxu0 0.0
    %410 = vmatprep.subr.mxu0 0.0
    %411 = vmatpush1.msra.mxu0 0.0
    %412 = vmatprep.subr.mxu0 0.0
    %413 = vmatpush1.msra.mxu0 0.0
    %414 = vmatprep.subr.mxu0 0.0
    %415 = vmatpush1.msra.mxu0 0.0
    %416 = vmatprep.subr.mxu0 0.0
    %417 = vmatpush1.msra.mxu0 0.0
    %418 = vmatprep.subr.mxu0 0.0
    %419 = vmatpush1.msra.mxu0 0.0
    %420 = vmatprep.subr.mxu0 0.0
    %421 = vmatpush1.msra.mxu0 0.0
    %422 = vmatprep.subr.mxu0 0.0
    %423 = vmatpush1.msra.mxu0 0.0
    %424 = vmatprep.subr.mxu0 0.0
    %425 = vmatpush1.msra.mxu0 0.0
    %426 = vmatprep.subr.mxu0 0.0
    %427 = vmatpush1.msra.mxu0 0.0
    %428 = vmatprep.subr.mxu0 0.0
    %429 = vmatpush1.msra.mxu0 0.0
    %430 = vmatprep.subr.mxu0 0.0
    %431 = vmatpush1.msra.mxu0 0.0
    %432 = vmatprep.subr.mxu0 0.0
    %433 = vmatpush1.msra.mxu0 0.0
    %434 = vmatprep.subr.mxu0 0.0
    %435 = vmatpush1.msra.mxu0 0.0
    %436 = vmatprep.subr.mxu0 0.0
    %437 = vmatpush1.msra.mxu0 0.0
    %438 = vmatprep.subr.mxu0 0.0
    %439 = vmatpush1.msra.mxu0 0.0
    %440 = vmatprep.subr.mxu0 0.0
    %441 = vmatpush1.msra.mxu0 0.0
    %442 = vmatprep.subr.mxu0 0.0
    %443 = vmatpush1.msra.mxu0 0.0
    %444 = vmatprep.subr.mxu0 0.0
    %445 = vmatpush1.msra.mxu0 0.0
    %446 = vmatprep.subr.mxu0 0.0
    %447 = vmatpush1.msra.mxu0 0.0
    %448 = vmatprep.subr.mxu0 0.0
    %449 = vmatpush1.msra.mxu0 0.0
    %450 = vmatprep.mubr.f32.mxu0 0.0
    %451 = vmatmul.mubr.f32.gmra.mrb[0].mxu0 %v381
    %v452 = vpop.f32.mrb[0].mxu0
    %v453 = vadd.f32 %v372, %v452
    %v454 = vpop.f32.mrb[0].mxu0
    %455 = vmatprep.mubr.f32.mxu0 0.0
    %456 = vmatmul.mubr.f32.gmra.mrb[0].mxu0 %v384
    %v457 = vpop.f32.mrb[0].mxu0
    %v458 = vadd.f32 %v377, %v457
    %v459 = vpop.f32.mrb[0].mxu0
    %460 = vdwg.mxu0
    %s461 = scalar_lea.vmem %s2, 16
    %v462 = vld [vmem:[%s461] sm:$0xff]
    %v464 = vsel %vm26, %v294, 0
    %v467 = vsel %vm26, %v295, 0
    %469 = vmatprep.subr.mxu0 0.0
    %470 = vmatpush1.msra.mxu0 %v462
    %471 = vmatprep.subr.mxu0 0.0
    %472 = vmatpush1.msra.mxu0 0.0
    %473 = vmatprep.subr.mxu0 0.0
    %474 = vmatpush1.msra.mxu0 0.0
    %475 = vmatprep.subr.mxu0 0.0
    %476 = vmatpush1.msra.mxu0 0.0
    %477 = vmatprep.subr.mxu0 0.0
    %478 = vmatpush1.msra.mxu0 0.0
    %479 = vmatprep.subr.mxu0 0.0
    %480 = vmatpush1.msra.mxu0 0.0
    %481 = vmatprep.subr.mxu0 0.0
    %482 = vmatpush1.msra.mxu0 0.0
    %483 = vmatprep.subr.mxu0 0.0
    %484 = vmatpush1.msra.mxu0 0.0
    %485 = vmatprep.subr.mxu0 0.0
    %486 = vmatpush1.msra.mxu0 0.0
    %487 = vmatprep.subr.mxu0 0.0
    %488 = vmatpush1.msra.mxu0 0.0
    %489 = vmatprep.subr.mxu0 0.0
    %490 = vmatpush1.msra.mxu0 0.0
    %491 = vmatprep.subr.mxu0 0.0
    %492 = vmatpush1.msra.mxu0 0.0
    %493 = vmatprep.subr.mxu0 0.0
    %494 = vmatpush1.msra.mxu0 0.0
    %495 = vmatprep.subr.mxu0 0.0
    %496 = vmatpush1.msra.mxu0 0.0
    %497 = vmatprep.subr.mxu0 0.0
    %498 = vmatpush1.msra.mxu0 0.0
    %499 = vmatprep.subr.mxu0 0.0
    %500 = vmatpush1.msra.mxu0 0.0
    %501 = vmatprep.subr.mxu0 0.0
    %502 = vmatpush1.msra.mxu0 0.0
    %503 = vmatprep.subr.mxu0 0.0
    %504 = vmatpush1.msra.mxu0 0.0
    %505 = vmatprep.subr.mxu0 0.0
    %506 = vmatpush1.msra.mxu0 0.0
    %507 = vmatprep.subr.mxu0 0.0
    %508 = vmatpush1.msra.mxu0 0.0
    %509 = vmatprep.subr.mxu0 0.0
    %510 = vmatpush1.msra.mxu0 0.0
    %511 = vmatprep.subr.mxu0 0.0
    %512 = vmatpush1.msra.mxu0 0.0
    %513 = vmatprep.subr.mxu0 0.0
    %514 = vmatpush1.msra.mxu0 0.0
    %515 = vmatprep.subr.mxu0 0.0
    %516 = vmatpush1.msra.mxu0 0.0
    %517 = vmatprep.subr.mxu0 0.0
    %518 = vmatpush1.msra.mxu0 0.0
    %519 = vmatprep.subr.mxu0 0.0
    %520 = vmatpush1.msra.mxu0 0.0
    %521 = vmatprep.subr.mxu0 0.0
    %522 = vmatpush1.msra.mxu0 0.0
    %523 = vmatprep.subr.mxu0 0.0
    %524 = vmatpush1.msra.mxu0 0.0
    %525 = vmatprep.subr.mxu0 0.0
    %526 = vmatpush1.msra.mxu0 0.0
    %527 = vmatprep.subr.mxu0 0.0
    %528 = vmatpush1.msra.mxu0 0.0
    %529 = vmatprep.subr.mxu0 0.0
    %530 = vmatpush1.msra.mxu0 0.0
    %531 = vmatprep.subr.mxu0 0.0
    %532 = vmatpush1.msra.mxu0 0.0
    %533 = vmatprep.mubr.f32.mxu0 0.0
    %534 = vmatmul.mubr.f32.gmra.mrb[0].mxu0 %v464
    %v535 = vpop.f32.mrb[0].mxu0
    %v536 = vadd.f32 0.0, %v535
    %v537 = vpop.f32.mrb[0].mxu0
    %538 = vmatprep.mubr.f32.mxu0 0.0
    %539 = vmatmul.mubr.f32.gmra.mrb[0].mxu0 %v467
    %v540 = vpop.f32.mrb[0].mxu0
    %v541 = vadd.f32 0.0, %v540
    %v542 = vpop.f32.mrb[0].mxu0
    %543 = vdwg.mxu0
    %v544 = vadd.f32 %v453, %v536
    %v545 = vadd.f32 %v458, %v541
    %v546 = vld [vmem:[%s4 + $0x1] sm:$0x1]
    %v547 = vlaneseq
    %v548 = vshrl.u32 %v547, 7
    %v549 = vsub.s32 0, %v548
    %v550 = vrot.slane %v546, %v549
    %v551 = vadd.f32 %v544, %v550
    %v552 = vadd.f32 %v545, %v550
    %v553 = vld [vmem:[%s3] sm:$0xff]
    %v554 = vld [vmem:[%s4 + $0x2] sm:$0x1]
    %v555 = vlaneseq
    %v556 = vshrl.u32 %v555, 7
    %v557 = vsub.s32 0, %v556
    %v558 = vrot.slane %v554, %v557
    %559 = vmatprep.subr.mxu0 0.0
    %560 = vmatpush1.msra.mxu0 %v553
    %561 = vmatprep.subr.mxu0 0.0
    %562 = vmatpush1.msra.mxu0 0.0
    %563 = vmatprep.subr.mxu0 0.0
    %564 = vmatpush1.msra.mxu0 0.0
    %565 = vmatprep.subr.mxu0 0.0
    %566 = vmatpush1.msra.mxu0 0.0
    %567 = vmatprep.subr.mxu0 0.0
    %568 = vmatpush1.msra.mxu0 0.0
    %569 = vmatprep.subr.mxu0 0.0
    %570 = vmatpush1.msra.mxu0 0.0
    %571 = vmatprep.subr.mxu0 0.0
    %572 = vmatpush1.msra.mxu0 0.0
    %573 = vmatprep.subr.mxu0 0.0
    %574 = vmatpush1.msra.mxu0 0.0
    %575 = vmatprep.subr.mxu0 0.0
    %576 = vmatpush1.msra.mxu0 0.0
    %577 = vmatprep.subr.mxu0 0.0
    %578 = vmatpush1.msra.mxu0 0.0
    %579 = vmatprep.subr.mxu0 0.0
    %580 = vmatpush1.msra.mxu0 0.0
    %581 = vmatprep.subr.mxu0 0.0
    %582 = vmatpush1.msra.mxu0 0.0
    %583 = vmatprep.subr.mxu0 0.0
    %584 = vmatpush1.msra.mxu0 0.0
    %585 = vmatprep.subr.mxu0 0.0
    %586 = vmatpush1.msra.mxu0 0.0
    %587 = vmatprep.subr.mxu0 0.0
    %588 = vmatpush1.msra.mxu0 0.0
    %589 = vmatprep.subr.mxu0 0.0
    %590 = vmatpush1.msra.mxu0 0.0
    %591 = vmatprep.subr.mxu0 0.0
    %592 = vmatpush1.msra.mxu0 0.0
    %593 = vmatprep.subr.mxu0 0.0
    %594 = vmatpush1.msra.mxu0 0.0
    %595 = vmatprep.subr.mxu0 0.0
    %596 = vmatpush1.msra.mxu0 0.0
    %597 = vmatprep.subr.mxu0 0.0
    %598 = vmatpush1.msra.mxu0 0.0
    %599 = vmatprep.subr.mxu0 0.0
    %600 = vmatpush1.msra.mxu0 0.0
    %601 = vmatprep.subr.mxu0 0.0
    %602 = vmatpush1.msra.mxu0 0.0
    %603 = vmatprep.subr.mxu0 0.0
    %604 = vmatpush1.msra.mxu0 0.0
    %605 = vmatprep.subr.mxu0 0.0
    %606 = vmatpush1.msra.mxu0 0.0
    %607 = vmatprep.subr.mxu0 0.0
    %608 = vmatpush1.msra.mxu0 0.0
    %609 = vmatprep.subr.mxu0 0.0
    %610 = vmatpush1.msra.mxu0 0.0
    %611 = vmatprep.subr.mxu0 0.0
    %612 = vmatpush1.msra.mxu0 0.0
    %613 = vmatprep.subr.mxu0 0.0
    %614 = vmatpush1.msra.mxu0 0.0
    %615 = vmatprep.subr.mxu0 0.0
    %616 = vmatpush1.msra.mxu0 0.0
    %617 = vmatprep.subr.mxu0 0.0
    %618 = vmatpush1.msra.mxu0 0.0
    %619 = vmatprep.subr.mxu0 0.0
    %620 = vmatpush1.msra.mxu0 0.0
    %621 = vmatprep.subr.mxu0 0.0
    %622 = vmatpush1.msra.mxu0 0.0
    %623 = vmatprep.mubr.f32.mxu0 0.0
    %624 = vmatmul.mubr.f32.gmra.mrb[0].mxu0 %v28
    %v625 = vpop.f32.mrb[0].mxu0
    %v626 = vadd.f32 %v558, %v625
    %v627 = vpop.f32.mrb[0].mxu0
    %628 = vmatprep.mubr.f32.mxu0 0.0
    %629 = vmatmul.mubr.f32.gmra.mrb[0].mxu0 %v31
    %v630 = vpop.f32.mrb[0].mxu0
    %v631 = vadd.f32 %v558, %v630
    %v632 = vpop.f32.mrb[0].mxu0
    %633 = vdwg.mxu0
    %v634 = vadd.f32 %v551, %v626
    %v635 = vadd.f32 %v552, %v631
    %v636 = vmax.f32 %v634, 0.0
    %v637 = vmax.f32 %v635, 0.0
    %638 = vst.msk [vmem:[#allocation3] sm:$0xff] %vm26, %v636
    %639 = vst.msk [vmem:[#allocation3 + $0x8] sm:$0xff] %vm26, %v637
    // Predicated region
    $region22: #{tpu_custom_call.1} parent=1 // pred_check
      _
    $region23: #{tpu_custom_call.1} parent=1 // pred_check_branch
      %641 = sbr.rel (0) target = $region25
    $region24: #{tpu_custom_call.1} parent=1 // pred_region
      %s643 = ssub.s32 256, 256
      %644 = vsyncadd [#allocation4], %s643
      %s645 = sshll.u32 [#allocation3], 4
      %s646 = int_to_ptr.vmem [resolvable:$true] %s645
      %651 = dma.vmem_to_hbm [thread:$0]  %s646, 256, %s5, [#allocation4], 128, 128, 8
    $region25: #{tpu_custom_call.1} parent=1 // pred_fallthru
      _
    // Predicated region
    $region26: #{tpu_custom_call.1} parent=1 // pred_check
      _
    $region27: #{tpu_custom_call.1} parent=1 // pred_check_branch
      %653 = sbr.rel (0) target = $region29
    $region28: #{tpu_custom_call.1} parent=1 // pred_region
      %654 = dma.done [#allocation4], 256
    $region29: #{tpu_custom_call.1} parent=1 // pred_fallthru
      _
    %655 = vsyncpa [#allocation4], 1

</llo_original>
